<compile_context>
chip_gen: v6e
topology: v6e:2x2x1
jax: 0.10.0
libtpu: 0.0.40
codegen_flags: <defaults>
</compile_context>

<pallas_src>
import functools

import jax
import jax.numpy as jnp
from jax import lax
from jax.experimental import pallas as pl
from jax.experimental.pallas import tpu as pltpu


# ---------------------------------------------------------------------------
# Kernel: fused log-softmax + focal modulation + weighted NLL partial sums.
# ---------------------------------------------------------------------------
def _focal_loss_kernel(logits_ref, target_ref, weight_ref,
                       loss_out_ref, wsum_out_ref, acc_ref, *,
                       gamma, ignore_index, n_rows, tile_n, grid_n,
                       steps_per_chunk):
    c = pl.program_id(0)                         # parallel chunk (megacore) axis
    s = pl.program_id(1)                         # sequential N-tile axis
    tile_idx = c * steps_per_chunk + s           # un-clamped global tile index
    step_valid = tile_idx < grid_n

    # Zero the per-chunk accumulators at the start of each chunk.
    @pl.when(s == 0)
    def _():
        acc_ref[0] = 0.0
        acc_ref[1] = 0.0

    @pl.when(step_valid)
    def _():
        logits = logits_ref[...].astype(jnp.float32)       # [T, C]
        tgt = target_ref[...]                              # [T, 1] int32
        w = weight_ref[...].astype(jnp.float32)            # [1, C]
        T, C = logits.shape

        # Numerically stable log_softmax with a single exp per element.
        m = jnp.max(logits, axis=-1, keepdims=True)
        shifted = logits - m
        e = jnp.exp(shifted)
        denom = jnp.sum(e, axis=-1, keepdims=True)
        log_pt = shifted - jnp.log(denom)
        # Exact reciprocal keeps full f32 accuracy (approx=True is available if
        # callers can tolerate ~1e-3 relative error).
        pt = e * pl.reciprocal(denom, approx=False)

        # (1 - pt) ** gamma — gamma is static; integer gamma = repeated multiply.
        one_minus_pt = 1.0 - pt
        g = float(gamma)
        if g == round(g) and g >= 0.0:
            focal = jnp.ones_like(one_minus_pt)
            for _ in range(int(round(g))):
                focal = focal * one_minus_pt
        else:
            focal = jnp.power(one_minus_pt, g)
        focal_log_pt = focal * log_pt                       # [T, C]

        # One-hot select replaces nll_loss's per-row gather.
        col = lax.broadcasted_iota(jnp.int32, (T, C), 1)
        one_hot = col == tgt
        sel_logpt = jnp.sum(jnp.where(one_hot, focal_log_pt, 0.0),
                            axis=-1, keepdims=True)         # [T, 1]
        sel_w = jnp.sum(jnp.where(one_hot, w, 0.0),
                        axis=-1, keepdims=True)              # [T, 1]

        # Mask rows past N (partial last tile) and ignore_index rows; where()
        # also blocks NaNs coming from garbage rows of the padded last block.
        row = tile_idx * tile_n + lax.broadcasted_iota(jnp.int32, (T, 1), 0)
        valid = (row < n_rows) & (tgt != ignore_index)

        acc_ref[0] += jnp.sum(jnp.where(valid, -sel_w * sel_logpt, 0.0))
        acc_ref[1] += jnp.sum(jnp.where(valid, sel_w, 0.0))

    # Emit per-chunk partials as lane-dense (8,128) slabs (lane 0 is consumed).
    @pl.when(s == steps_per_chunk - 1)
    def _():
        loss_out_ref[...] = jnp.full(loss_out_ref.shape, acc_ref[0], jnp.float32)
        wsum_out_ref[...] = jnp.full(wsum_out_ref.shape, acc_ref[1], jnp.float32)


# ---------------------------------------------------------------------------
# Tile sizing: use the *padded* VMEM footprint (C lanes pad to mult of 128,
# the int32 target column pads to 128 lanes).  Conservative budget fits the
# scoped-VMEM default on v5e/v6e/v7x with double buffering.
# ---------------------------------------------------------------------------
def _choose_tile_n(n, c, itemsize):
    c_pad = ((c + 127) // 128) * 128
    bytes_per_row = c_pad * itemsize + 128 * 4
    budget = 8 * 1024 * 1024
    tile = budget // (2 * bytes_per_row)
    tile = int(max(8, min(tile, 1024)))
    tile = (tile // 8) * 8
    if tile >= n:
        return n                      # one full-dim block (any size allowed)
    return tile


# ---------------------------------------------------------------------------
# Wrapper — matches FocalLoss(gamma, weight, reduction, ignore_index).forward
# ---------------------------------------------------------------------------
def focal_loss(logits, target, *, gamma=2, weight=None, reduction="mean",
               ignore_index=-100, tile_n=None, num_chunks=2):
    if reduction not in ("mean", "sum"):
        # TODO(synk): reduction='none' (per-sample vector output) not implemented.
        raise NotImplementedError(f"reduction={reduction!r} not supported")

    n, c = logits.shape
    if weight is None:
        weight = jnp.ones((c,), jnp.float32)
    weight2d = weight.astype(jnp.float32).reshape(1, c)
    target2d = target.astype(jnp.int32).reshape(n, 1)

    if tile_n is None:
        tile_n = _choose_tile_n(n, c, logits.dtype.itemsize)
    assert tile_n == n or tile_n % 8 == 0, "tile_n must be N or a multiple of 8"

    grid_n = pl.cdiv(n, tile_n)
    num_chunks = max(1, min(num_chunks, grid_n))   # v7x: 2 TCs; harmless on 1 TC
    steps_per_chunk = pl.cdiv(grid_n, num_chunks)

    def tile_map(ci, si):
        # Clamp so the (possibly) extra step of the last chunk stays in bounds;
        # the kernel masks its contribution to zero via step_valid.
        return (jnp.minimum(ci * steps_per_chunk + si, grid_n - 1), 0)

    kernel = functools.partial(
        _focal_loss_kernel, gamma=gamma, ignore_index=ignore_index,
        n_rows=n, tile_n=tile_n, grid_n=grid_n,
        steps_per_chunk=steps_per_chunk)

    loss_parts, wsum_parts = pl.pallas_call(
        kernel,
        grid=(num_chunks, steps_per_chunk),
        in_specs=[
            pl.BlockSpec((tile_n, c), tile_map),             # logits (orig dtype)
            pl.BlockSpec((tile_n, 1), tile_map),             # targets
            pl.BlockSpec((1, c), lambda ci, si: (0, 0)),     # class weights
        ],
        out_specs=[
            pl.BlockSpec((1, 8, 128), lambda ci, si: (ci, 0, 0)),
            pl.BlockSpec((1, 8, 128), lambda ci, si: (ci, 0, 0)),
        ],
        out_shape=[
            jax.ShapeDtypeStruct((num_chunks, 8, 128), jnp.float32),
            jax.ShapeDtypeStruct((num_chunks, 8, 128), jnp.float32),
        ],
        scratch_shapes=[pltpu.SMEM((2,), jnp.float32)],      # [loss_sum, w_sum]
        compiler_params=pltpu.CompilerParams(
            dimension_semantics=("parallel", "arbitrary"),
            vmem_limit_bytes=32 * 1024 * 1024),
    )(logits, target2d, weight2d)

    loss_total = jnp.sum(loss_parts[:, 0, 0])
    if reduction == "sum":
        return loss_total
    # 'mean': nll_loss divides by the summed class-weights of the valid targets.
    # (All-ignored batches divide by zero -> NaN, matching PyTorch.)
    return loss_total / jnp.sum(wsum_parts[:, 0, 0])


# ---------------------------------------------------------------------------
# Pure-JAX reference (mirrors the PyTorch module exactly) for verification.
# ---------------------------------------------------------------------------
def focal_loss_ref(logits, target, *, gamma=2, weight=None, reduction="mean",
                   ignore_index=-100):
    n, c = logits.shape
    if weight is None:
        weight = jnp.ones((c,), jnp.float32)
    log_pt = jax.nn.log_softmax(logits.astype(jnp.float32), axis=1)
    pt = jnp.exp(log_pt)
    log_pt = (1.0 - pt) ** gamma * log_pt
    valid = target != ignore_index
    tsafe = jnp.where(valid, target, 0)
    picked = jnp.take_along_axis(log_pt, tsafe[:, None], axis=1)[:, 0]
    wt = weight[tsafe].astype(jnp.float32) * valid.astype(jnp.float32)
    losses = -wt * picked
    if reduction == "mean":
        return jnp.sum(losses) / jnp.sum(wt)
    return jnp.sum(losses)


if __name__ == "__main__":
    key = jax.random.PRNGKey(0)
    k1, k2, k3, k4 = jax.random.split(key, 4)

    C = 8

    # Case 1: default config (gamma=2, mean, no weight), f32, single tile.
    N = 32
    logits = jax.random.normal(k1, (N, C), jnp.float32)
    target = jax.random.randint(k2, (N,), 0, C, jnp.int32).at[3].set(-100)
    class_w = jnp.linspace(0.5, 1.5, C, dtype=jnp.float32)

    loss = focal_loss(logits, target)
    ref = focal_loss_ref(logits, target)

    loss_w = focal_loss(logits, target, weight=class_w, reduction="sum")
    ref_w = focal_loss_ref(logits, target, weight=class_w, reduction="sum")

    # Case 2: multi-tile grid + 2 parallel chunks + partial last tile +
    # clamped/masked extra grid step, bf16 input streamed without upcast.
    N2 = 200
    logits2 = jax.random.normal(k3, (N2, C), jnp.float32).astype(jnp.bfloat16)
    target2 = jax.random.randint(k4, (N2,), 0, C, jnp.int32)
    target2 = target2.at[0].set(-100).at[137].set(-100)

    loss2 = focal_loss(logits2, target2, weight=class_w, tile_n=80)
    ref2 = focal_loss_ref(logits2, target2, weight=class_w)

    jax.block_until_ready((loss, loss_w, loss2))

    assert loss.shape == ()
    assert jnp.allclose(loss, ref, rtol=1e-5, atol=1e-5), (loss, ref)
    assert jnp.allclose(loss_w, ref_w, rtol=1e-5, atol=1e-5), (loss_w, ref_w)
    assert jnp.allclose(loss2, ref2, rtol=1e-4, atol=1e-4), (loss2, ref2)

    print("KERNEL_OK")
</pallas_src>

<mosaic_0001>
module attributes {stable_mosaic.version = 11 : i64} {
  func.func @_focal_loss_kernel(%arg0: i32, %arg1: i32, %arg2: memref<32x8xf32, #tpu.memory_space<vmem>>, %arg3: memref<32x1xi32, #tpu.memory_space<vmem>>, %arg4: memref<1x8xf32, #tpu.memory_space<vmem>>, %arg5: memref<1x8x128xf32, #tpu.memory_space<vmem>>, %arg6: memref<1x8x128xf32, #tpu.memory_space<vmem>>, %arg7: memref<2xf32, #tpu.memory_space<smem>>) attributes {dimension_semantics = [#tpu.dimension_semantics<parallel>, #tpu.dimension_semantics<arbitrary>], iteration_bounds = array<i64: 1, 1>, scalar_prefetch = 0 : i64, scratch_operands = 1 : i64, tpu.core_type = #tpu.core_type<tc>, window_params = [{transform_indices = @transform_0, window_bounds = array<i64: 32, 8>}, {transform_indices = @transform_1, window_bounds = array<i64: 32, 1>}, {pipeline_mode = #tpu.pipeline_mode<synchronous>, transform_indices = @transform_2, window_bounds = array<i64: 1, 8>}, {transform_indices = @transform_3, window_bounds = array<i64: 1, 8, 128>}, {transform_indices = @transform_4, window_bounds = array<i64: 1, 8, 128>}]} {
    %c1_i32 = arith.constant 1 : i32
    %0 = arith.muli %arg0, %c1_i32 : i32
    %1 = arith.addi %0, %arg1 : i32
    %c1_i32_0 = arith.constant 1 : i32
    %2 = arith.cmpi slt, %1, %c1_i32_0 : i32
    %c0_i32 = arith.constant 0 : i32
    %3 = arith.cmpi eq, %arg1, %c0_i32 : i32
    %4 = arith.extui %3 : i1 to i32
    %c0_i32_1 = arith.constant 0 : i32
    %5 = arith.cmpi ne, %4, %c0_i32_1 : i32
    scf.if %5 {
      %cst = arith.constant 0.000000e+00 : f32
      %c0 = arith.constant 0 : index
      %11 = memref.load %arg7[%c0] : memref<2xf32, #tpu.memory_space<smem>>
      memref.store %cst, %arg7[%c0] : memref<2xf32, #tpu.memory_space<smem>>
      %cst_5 = arith.constant 0.000000e+00 : f32
      %c1 = arith.constant 1 : index
      %12 = memref.load %arg7[%c1] : memref<2xf32, #tpu.memory_space<smem>>
      memref.store %cst_5, %arg7[%c1] : memref<2xf32, #tpu.memory_space<smem>>
    } else {
    }
    %6 = arith.extui %2 : i1 to i32
    %c0_i32_2 = arith.constant 0 : i32
    %7 = arith.cmpi ne, %6, %c0_i32_2 : i32
    scf.if %7 {
      %c0 = arith.constant 0 : index
      %c0_5 = arith.constant 0 : index
      %11 = vector.load %arg2[%c0, %c0_5] : memref<32x8xf32, #tpu.memory_space<vmem>>, vector<32x8xf32>
      %c0_6 = arith.constant 0 : index
      %c0_7 = arith.constant 0 : index
      %12 = vector.load %arg3[%c0_6, %c0_7] : memref<32x1xi32, #tpu.memory_space<vmem>>, vector<32x1xi32>
      %c0_8 = arith.constant 0 : index
      %c0_9 = arith.constant 0 : index
      %13 = vector.load %arg4[%c0_8, %c0_9] : memref<1x8xf32, #tpu.memory_space<vmem>>, vector<1x8xf32>
      %cst = arith.constant dense<0xFF800000> : vector<32xf32>
      %14 = vector.multi_reduction <maximumf>, %11, %cst [1] : vector<32x8xf32> to vector<32xf32>
      %15 = vector.shape_cast %14 : vector<32xf32> to vector<32x1xf32>
      %16 = vector.broadcast %15 : vector<32x1xf32> to vector<32x8xf32>
      %17 = arith.subf %11, %16 : vector<32x8xf32>
      %18 = math.exp %17 : vector<32x8xf32>
      %cst_10 = arith.constant dense<0.000000e+00> : vector<32xf32>
      %19 = vector.multi_reduction <add>, %18, %cst_10 [1] : vector<32x8xf32> to vector<32xf32>
      %20 = vector.shape_cast %19 : vector<32xf32> to vector<32x1xf32>
      %21 = math.log %20 : vector<32x1xf32>
      %22 = vector.broadcast %21 : vector<32x1xf32> to vector<32x8xf32>
      %23 = arith.subf %17, %22 : vector<32x8xf32>
      %24 = tpu.reciprocal %20 : vector<32x1xf32> -> vector<32x1xf32>
      %25 = vector.broadcast %24 : vector<32x1xf32> to vector<32x8xf32>
      %26 = arith.mulf %18, %25 : vector<32x8xf32>
      %cst_11 = arith.constant 1.000000e+00 : f32
      %27 = vector.broadcast %cst_11 : f32 to vector<32x8xf32>
      %28 = arith.subf %27, %26 : vector<32x8xf32>
      %cst_12 = arith.constant 1.000000e+00 : f32
      %29 = vector.broadcast %cst_12 : f32 to vector<32x8xf32>
      %30 = arith.mulf %29, %28 : vector<32x8xf32>
      %31 = arith.mulf %30, %28 : vector<32x8xf32>
      %32 = arith.mulf %31, %23 : vector<32x8xf32>
      %33 = tpu.iota {dimensions = array<i32: 1>} : vector<32x8xi32>
      %34 = vector.broadcast %12 : vector<32x1xi32> to vector<32x8xi32>
      %35 = arith.cmpi eq, %33, %34 : vector<32x8xi32>
      %cst_13 = arith.constant 0.000000e+00 : f32
      %36 = vector.broadcast %cst_13 : f32 to vector<32x8xf32>
      %37 = arith.select %35, %32, %36 : vector<32x8xi1>, vector<32x8xf32>
      %cst_14 = arith.constant dense<0.000000e+00> : vector<32xf32>
      %38 = vector.multi_reduction <add>, %37, %cst_14 [1] : vector<32x8xf32> to vector<32xf32>
      %39 = vector.shape_cast %38 : vector<32xf32> to vector<32x1xf32>
      %cst_15 = arith.constant 0.000000e+00 : f32
      %40 = vector.shape_cast %13 : vector<1x8xf32> to vector<1x8xf32>
      %41 = vector.broadcast %40 : vector<1x8xf32> to vector<32x8xf32>
      %42 = vector.broadcast %cst_15 : f32 to vector<32x8xf32>
      %43 = arith.select %35, %41, %42 : vector<32x8xi1>, vector<32x8xf32>
      %cst_16 = arith.constant dense<0.000000e+00> : vector<32xf32>
      %44 = vector.multi_reduction <add>, %43, %cst_16 [1] : vector<32x8xf32> to vector<32xf32>
      %45 = vector.shape_cast %44 : vector<32xf32> to vector<32x1xf32>
      %c32_i32 = arith.constant 32 : i32
      %46 = arith.muli %1, %c32_i32 : i32
      %47 = tpu.iota {dimensions = array<i32: 0>} : vector<32x1xi32>
      %48 = vector.broadcast %46 : i32 to vector<32x1xi32>
      %49 = arith.addi %48, %47 : vector<32x1xi32>
      %c32_i32_17 = arith.constant 32 : i32
      %50 = vector.broadcast %c32_i32_17 : i32 to vector<32x1xi32>
      %51 = arith.cmpi slt, %49, %50 : vector<32x1xi32>
      %c-100_i32 = arith.constant -100 : i32
      %52 = vector.broadcast %c-100_i32 : i32 to vector<32x1xi32>
      %53 = arith.cmpi ne, %12, %52 : vector<32x1xi32>
      %54 = arith.andi %51, %53 : vector<32x1xi1>
      %c0_18 = arith.constant 0 : index
      %55 = memref.load %arg7[%c0_18] : memref<2xf32, #tpu.memory_space<smem>>
      %cst_19 = arith.constant 0.000000e+00 : f32
      %56 = vector.broadcast %cst_19 : f32 to vector<32x1xf32>
      %57 = arith.subf %56, %45 : vector<32x1xf32>
      %58 = arith.mulf %57, %39 : vector<32x1xf32>
      %cst_20 = arith.constant 0.000000e+00 : f32
      %59 = vector.broadcast %cst_20 : f32 to vector<32x1xf32>
      %60 = arith.select %54, %58, %59 : vector<32x1xi1>, vector<32x1xf32>
      %61 = vector.shape_cast %60 : vector<32x1xf32> to vector<1x32x1xf32>
      %cst_21 = arith.constant dense<0.000000e+00> : vector<1xf32>
      %62 = vector.multi_reduction <add>, %61, %cst_21 [1, 2] : vector<1x32x1xf32> to vector<1xf32>
      %63 = vector.shape_cast %62 : vector<1xf32> to vector<1x1x1xf32>
      %64 = vector.extract %63[0, 0, 0] : f32 from vector<1x1x1xf32>
      %65 = arith.addf %55, %64 : f32
      %c0_22 = arith.constant 0 : index
      %66 = memref.load %arg7[%c0_22] : memref<2xf32, #tpu.memory_space<smem>>
      memref.store %65, %arg7[%c0_22] : memref<2xf32, #tpu.memory_space<smem>>
      %c1 = arith.constant 1 : index
      %67 = memref.load %arg7[%c1] : memref<2xf32, #tpu.memory_space<smem>>
      %cst_23 = arith.constant 0.000000e+00 : f32
      %68 = vector.broadcast %cst_23 : f32 to vector<32x1xf32>
      %69 = arith.select %54, %45, %68 : vector<32x1xi1>, vector<32x1xf32>
      %70 = vector.shape_cast %69 : vector<32x1xf32> to vector<1x32x1xf32>
      %cst_24 = arith.constant dense<0.000000e+00> : vector<1xf32>
      %71 = vector.multi_reduction <add>, %70, %cst_24 [1, 2] : vector<1x32x1xf32> to vector<1xf32>
      %72 = vector.shape_cast %71 : vector<1xf32> to vector<1x1x1xf32>
      %73 = vector.extract %72[0, 0, 0] : f32 from vector<1x1x1xf32>
      %74 = arith.addf %67, %73 : f32
      %c1_25 = arith.constant 1 : index
      %75 = memref.load %arg7[%c1_25] : memref<2xf32, #tpu.memory_space<smem>>
      memref.store %74, %arg7[%c1_25] : memref<2xf32, #tpu.memory_space<smem>>
    } else {
    }
    %c0_i32_3 = arith.constant 0 : i32
    %8 = arith.cmpi eq, %arg1, %c0_i32_3 : i32
    %9 = arith.extui %8 : i1 to i32
    %c0_i32_4 = arith.constant 0 : i32
    %10 = arith.cmpi ne, %9, %c0_i32_4 : i32
    scf.if %10 {
      %c0 = arith.constant 0 : index
      %11 = memref.load %arg7[%c0] : memref<2xf32, #tpu.memory_space<smem>>
      %12 = vector.broadcast %11 : f32 to vector<1x8x128xf32>
      %c0_5 = arith.constant 0 : index
      %c0_6 = arith.constant 0 : index
      %c0_7 = arith.constant 0 : index
      %13 = vector.load %arg5[%c0_5, %c0_6, %c0_7] : memref<1x8x128xf32, #tpu.memory_space<vmem>>, vector<1x8x128xf32>
      tpu.vector_store %arg5[%c0_5, %c0_6, %c0_7], %12 {strides = array<i32>} : memref<1x8x128xf32, #tpu.memory_space<vmem>>, vector<1x8x128xf32>,
      %c1 = arith.constant 1 : index
      %14 = memref.load %arg7[%c1] : memref<2xf32, #tpu.memory_space<smem>>
      %15 = vector.broadcast %14 : f32 to vector<1x8x128xf32>
      %c0_8 = arith.constant 0 : index
      %c0_9 = arith.constant 0 : index
      %c0_10 = arith.constant 0 : index
      %16 = vector.load %arg6[%c0_8, %c0_9, %c0_10] : memref<1x8x128xf32, #tpu.memory_space<vmem>>, vector<1x8x128xf32>
      tpu.vector_store %arg6[%c0_8, %c0_9, %c0_10], %15 {strides = array<i32>} : memref<1x8x128xf32, #tpu.memory_space<vmem>>, vector<1x8x128xf32>,
    } else {
    }
    return
  }
  func.func @transform_0(%arg0: i32, %arg1: i32) -> (i32, i32) {
    %c1_i32 = arith.constant 1 : i32
    %0 = arith.muli %arg0, %c1_i32 : i32
    %1 = arith.addi %0, %arg1 : i32
    %c0_i32 = arith.constant 0 : i32
    %2 = arith.minsi %1, %c0_i32 : i32
    %c0_i32_0 = arith.constant 0 : i32
    %c0_i32_1 = arith.constant 0 : i32
    return %2, %c0_i32_0 : i32, i32
  }
  func.func @transform_1(%arg0: i32, %arg1: i32) -> (i32, i32) {
    %c1_i32 = arith.constant 1 : i32
    %0 = arith.muli %arg0, %c1_i32 : i32
    %1 = arith.addi %0, %arg1 : i32
    %c0_i32 = arith.constant 0 : i32
    %2 = arith.minsi %1, %c0_i32 : i32
    %c0_i32_0 = arith.constant 0 : i32
    %c0_i32_1 = arith.constant 0 : i32
    return %2, %c0_i32_0 : i32, i32
  }
  func.func @transform_2(%arg0: i32, %arg1: i32) -> (i32, i32) {
    %c0_i32 = arith.constant 0 : i32
    %c0_i32_0 = arith.constant 0 : i32
    %c0_i32_1 = arith.constant 0 : i32
    return %c0_i32, %c0_i32_0 : i32, i32
  }
  func.func @transform_3(%arg0: i32, %arg1: i32) -> (i32, i32, i32) {
    %c0_i32 = arith.constant 0 : i32
    %c0_i32_0 = arith.constant 0 : i32
    %c0_i32_1 = arith.constant 0 : i32
    return %arg0, %c0_i32, %c0_i32_0 : i32, i32, i32
  }
  func.func @transform_4(%arg0: i32, %arg1: i32) -> (i32, i32, i32) {
    %c0_i32 = arith.constant 0 : i32
    %c0_i32_0 = arith.constant 0 : i32
    %c0_i32_1 = arith.constant 0 : i32
    return %arg0, %c0_i32, %c0_i32_0 : i32, i32, i32
  }
}

</mosaic_0001>

<llo_original>
// kernel: tpu_custom_call.1
$region0: #{tpu_custom_call.1}
  #allocation0 [shape = 'u32[]', space=smem, size = 0x4, offset = 0x4, fixed_abs, tag = 'smem constant byte address 0x4 - core index']
  #allocation1 [shape = 'u32[144,128]{1,0:T(1,128)}', space=vmem, size = 0x12000, scoped, tag = 'internal scratch']
  #allocation2 [shape = 'f32[2]{0:T(128)}', space=smem, size = 0x200, scoped, tag = 'scratch operand']
  %s0 = inlined_call_operand.vmem [shape: f32[32,8], index: 0, kind: input, shape index: {}]
  %s1 = inlined_call_operand.vmem [shape: s32[32,1], index: 1, kind: input, shape index: {}]
  %s2 = inlined_call_operand.vmem [shape: f32[1,8], index: 2, kind: input, shape index: {}]
  %s3 = inlined_call_operand.hbm [shape: f32[1,8,128], index: 3, kind: output, shape index: {0}]
  %s4 = inlined_call_operand.hbm [shape: f32[1,8,128], index: 4, kind: output, shape index: {1}]
  %5 = xla_tuple %s3, %s4
  %s6 = sld [smem:[#allocation0]]
  $region42: #{tpu_custom_call.1} parent=0
    _
  %s8 = ssub.s32 1, %s6
  %s9 = scalar_select 0, %s8, %s6
  $region1: #{tpu_custom_call.1} parent=0
    #allocation3 [shape = 'u8[4096]{0}', space=vmem, size = 0x1000, scoped, tag = 'output window, operand 0, single buffered']
    #allocation4 [shape = 's32[1]{0}', space=sflag, size = 0x4, scoped, tag = 'scoped memory for tpu_custom_call.1']
    #allocation5 [shape = 'u8[4096]{0}', space=vmem, size = 0x1000, scoped, tag = 'output window, operand 1, single buffered']
    #allocation6 [shape = 's32[1]{0}', space=sflag, size = 0x4, scoped, tag = 'scoped memory for tpu_custom_call.1']
    %10 = vsyncpa [#allocation4], 0
    %11 = vsyncpa [#allocation6], 0
    // Predicated region
    $region2: #{tpu_custom_call.1} parent=1 // pred_check
      _
    $region3: #{tpu_custom_call.1} parent=1 // pred_check_branch
      %13 = sbr.rel (0) target = $region5
    $region4: #{tpu_custom_call.1} parent=1 // pred_region
      %s14 = sadd.s32 0, 0
      %p15 = scmp.lt.s32.totalorder %s14, 0
      %s16 = scalar_select %p15, %s14, 0
      %s17 = smul.u32 4, %s16
      %p18 = scmp.lt.s32.totalorder %s17, 3
      %s19 = scalar_select %p18, %s17, 3
      %s20 = smul.addr %s19, 8
      %s21 = scalar_lea.vmem %s0, %s20
      %s22 = sadd.s32 0, 0
      %p23 = scmp.lt.s32.totalorder %s22, 0
      %s24 = scalar_select %p23, %s22, 0
      %s25 = smul.u32 4, %s24
    $region5: #{tpu_custom_call.1} parent=1 // pred_fallthru
      _
    // Predicated region
    $region6: #{tpu_custom_call.1} parent=1 // pred_check
      _
    $region7: #{tpu_custom_call.1} parent=1 // pred_check_branch
      %27 = sbr.rel (0) target = $region9
    $region8: #{tpu_custom_call.1} parent=1 // pred_region
      %s28 = sadd.s32 0, 0
      %p29 = scmp.lt.s32.totalorder %s28, 0
      %s30 = scalar_select %p29, %s28, 0
      %s31 = smul.u32 4, %s30
      %p32 = scmp.lt.s32.totalorder %s31, 3
      %s33 = scalar_select %p32, %s31, 3
      %s34 = smul.addr %s33, 8
      %s35 = scalar_lea.vmem %s1, %s34
      %s36 = sadd.s32 0, 0
      %p37 = scmp.lt.s32.totalorder %s36, 0
      %s38 = scalar_select %p37, %s36, 0
      %s39 = smul.u32 4, %s38
    $region9: #{tpu_custom_call.1} parent=1 // pred_fallthru
      _
    // Predicated region
    $region10: #{tpu_custom_call.1} parent=1 // pred_check
      _
    $region11: #{tpu_custom_call.1} parent=1 // pred_check_branch
      %41 = sbr.rel (0) target = $region13
    $region12: #{tpu_custom_call.1} parent=1 // pred_region
      _
    $region13: #{tpu_custom_call.1} parent=1 // pred_fallthru
      _
    %s42 = sadd.s32 0, 0
    %p43 = scmp.lt.s32.totalorder %s42, 0
    %s44 = scalar_select %p43, %s42, 0
    %s45 = smul.u32 4, %s44
    %p46 = scmp.lt.s32.totalorder %s45, 3
    %s47 = scalar_select %p46, %s45, 3
    %s48 = smul.addr %s47, 8
    %s49 = scalar_lea.vmem %s0, %s48
    %s50 = sadd.s32 0, 0
    %p51 = scmp.lt.s32.totalorder %s50, 0
    %s52 = scalar_select %p51, %s50, 0
    %s53 = smul.u32 4, %s52
    %p54 = scmp.lt.s32.totalorder %s53, 3
    %s55 = scalar_select %p54, %s53, 3
    %s56 = smul.addr %s55, 8
    %s57 = scalar_lea.vmem %s1, %s56
    %s58 = sadd.s32 0, 0
    %p59 = scmp.lt.s32.totalorder %s58, 0
    %s60 = scalar_select %p59, %s58, 0
    %s61 = smul.u32 4, %s60
    %p62 = scmp.lt.s32.totalorder %s61, 3
    %s63 = scalar_select %p62, %s61, 3
    %s64 = smul.addr %s63, 8
    %s65 = scalar_lea.vmem %s0, %s64
    %s66 = sadd.s32 0, 0
    %p67 = scmp.lt.s32.totalorder %s66, 0
    %s68 = scalar_select %p67, %s66, 0
    %s69 = smul.u32 4, %s68
    %s70 = sadd.s32 0, 0
    %p71 = scmp.lt.s32.totalorder %s70, 0
    %s72 = scalar_select %p71, %s70, 0
    %s73 = smul.u32 4, %s72
    %p74 = scmp.lt.s32.totalorder %s73, 3
    %s75 = scalar_select %p74, %s73, 3
    %s76 = smul.addr %s75, 8
    %s77 = scalar_lea.vmem %s1, %s76
    %s78 = sadd.s32 0, 0
    %p79 = scmp.lt.s32.totalorder %s78, 0
    %s80 = scalar_select %p79, %s78, 0
    %s81 = smul.u32 4, %s80
    %s82 = sadd.s32 0, 0
    %p83 = scmp.lt.s32.totalorder %s82, 1
    %p84 = scmp.eq.s32.totalorder 0, 0
    // Predicated region
    $region14: #{tpu_custom_call.1} parent=1 // pred_check
      %p85 = pneg %p84
    $region15: #{tpu_custom_call.1} parent=1 // pred_check_branch
      %87 = sbr.rel (%p85) target = $region17
    $region16: #{tpu_custom_call.1} parent=1 // pred_region
      %s88 = scalar_lea.smem [#allocation2], 0
      %89 = sst [smem:[%s88]] 0.0
      %s90 = scalar_lea.smem [#allocation2], 1
      %91 = sst [smem:[%s90]] 0.0
    $region17: #{tpu_custom_call.1} parent=1 // pred_fallthru
      _
    // Predicated region
    $region18: #{tpu_custom_call.1} parent=1 // pred_check
      %p92 = pneg %p83
    $region19: #{tpu_custom_call.1} parent=1 // pred_check_branch
      %94 = sbr.rel (%p92) target = $region21
    $region20: #{tpu_custom_call.1} parent=1 // pred_region
      %v95 = vld [vmem:[%s65] sm:$0xff]
      %v96 = vld [vmem:[%s65 + $0x8] sm:$0xff]
      %v97 = vld [vmem:[%s65 + $0x10] sm:$0xff]
      %v98 = vld [vmem:[%s65 + $0x18] sm:$0xff]
      %v99 = vld [vmem:[%s77] sm:$0xff]
      %v100 = vld [vmem:[%s77 + $0x8] sm:$0xff]
      %v101 = vld [vmem:[%s77 + $0x10] sm:$0xff]
      %v102 = vld [vmem:[%s77 + $0x18] sm:$0xff]
      %v103 = vld [vmem:[%s2] sm:$0x1]
      %vm104 = vcmask 64512
      %v105 = vsel %vm104, %v95, -inf
      %106 = vmax.xlane.f32.xlu0 %v105
      %v107 = vpop.xlane.xlu0 %106
      %v108 = vsel %vm104, %v96, -inf
      %109 = vmax.xlane.f32.xlu0 %v108
      %v110 = vpop.xlane.xlu0 %109
      %v111 = vsel %vm104, %v97, -inf
      %112 = vmax.xlane.f32.xlu0 %v111
      %v113 = vpop.xlane.xlu0 %112
      %v114 = vsel %vm104, %v98, -inf
      %115 = vmax.xlane.f32.xlu0 %v114
      %v116 = vpop.xlane.xlu0 %115
      %v117 = vsub.f32 %v95, %v107
      %v118 = vsub.f32 %v96, %v110
      %v119 = vsub.f32 %v97, %v113
      %v120 = vsub.f32 %v98, %v116
      %v121 = vmul.f32 %v117, 1.442695
      %v122 = vpow.pop %v121
      %v123 = vmul.f32 %v118, 1.442695
      %v124 = vpow.pop %v123
      %v125 = vmul.f32 %v119, 1.442695
      %v126 = vpow.pop %v125
      %v127 = vmul.f32 %v120, 1.442695
      %v128 = vpow.pop %v127
      %v129 = vsel %vm104, %v122, 0.0
      %130 = vadd.xlane.f32.xlu0 %v129
      %v131 = vpop.xlane.xlu0 %130
      %v132 = vsel %vm104, %v124, 0.0
      %133 = vadd.xlane.f32.xlu0 %v132
      %v134 = vpop.xlane.xlu0 %133
      %v135 = vsel %vm104, %v126, 0.0
      %136 = vadd.xlane.f32.xlu0 %v135
      %v137 = vpop.xlane.xlu0 %136
      %v138 = vsel %vm104, %v128, 0.0
      %139 = vadd.xlane.f32.xlu0 %v138
      %v140 = vpop.xlane.xlu0 %139
      %v141 = vlog2.pop %v131
      %v142 = vmul.f32 %v141, 0.6931472
      %v143 = vlog2.pop %v134
      %v144 = vmul.f32 %v143, 0.6931472
      %v145 = vlog2.pop %v137
      %v146 = vmul.f32 %v145, 0.6931472
      %v147 = vlog2.pop %v140
      %v148 = vmul.f32 %v147, 0.6931472
      %v149 = vsub.f32 %v117, %v142
      %v150 = vsub.f32 %v118, %v144
      %v151 = vsub.f32 %v119, %v146
      %v152 = vsub.f32 %v120, %v148
      %v153 = vrcp.pop %v131
      %v154 = vrcp.pop %v134
      %v155 = vrcp.pop %v137
      %v156 = vrcp.pop %v140
      %v157 = vmul.f32 %v122, %v153
      %v158 = vmul.f32 %v124, %v154
      %v159 = vmul.f32 %v126, %v155
      %v160 = vmul.f32 %v128, %v156
      %v161 = vsub.f32 1.0, %v157
      %v162 = vsub.f32 1.0, %v158
      %v163 = vsub.f32 1.0, %v159
      %v164 = vsub.f32 1.0, %v160
      %v165 = vmul.f32 %v161, %v161
      %v166 = vmul.f32 %v162, %v162
      %v167 = vmul.f32 %v163, %v163
      %v168 = vmul.f32 %v164, %v164
      %v169 = vmul.f32 %v165, %v149
      %v170 = vmul.f32 %v166, %v150
      %v171 = vmul.f32 %v167, %v151
      %v172 = vmul.f32 %v168, %v152
      %v173 = vlaneseq
      %v174 = vand.u32 %v173, 127
      %175 = vset.pattern.permute.xlu0 0
      %176 = vperm.xlu0 %175, %v99
      %v177 = vpop.permute.xlu0 %176
      %178 = vset.pattern.permute.xlu0 0
      %179 = vperm.xlu0 %178, %v100
      %v180 = vpop.permute.xlu0 %179
      %181 = vset.pattern.permute.xlu0 0
      %182 = vperm.xlu0 %181, %v101
      %v183 = vpop.permute.xlu0 %182
      %184 = vset.pattern.permute.xlu0 0
      %185 = vperm.xlu0 %184, %v102
      %v186 = vpop.permute.xlu0 %185
      %vm187 = vcmp.eq.s32.totalorder %v174, %v177
      %vm188 = vcmp.eq.s32.totalorder %v174, %v180
      %vm189 = vcmp.eq.s32.totalorder %v174, %v183
      %vm190 = vcmp.eq.s32.totalorder %v174, %v186
      %v191 = vsel %vm187, %v169, 0.0
      %v192 = vsel %vm188, %v170, 0.0
      %v193 = vsel %vm189, %v171, 0.0
      %v194 = vsel %vm190, %v172, 0.0
      %v195 = vsel %vm104, %v191, 0.0
      %196 = vadd.xlane.f32.xlu0 %v195
      %v197 = vpop.xlane.xlu0 %196
      %v198 = vsel %vm104, %v192, 0.0
      %199 = vadd.xlane.f32.xlu0 %v198
      %v200 = vpop.xlane.xlu0 %199
      %v201 = vsel %vm104, %v193, 0.0
      %202 = vadd.xlane.f32.xlu0 %v201
      %v203 = vpop.xlane.xlu0 %202
      %v204 = vsel %vm104, %v194, 0.0
      %205 = vadd.xlane.f32.xlu0 %v204
      %v206 = vpop.xlane.xlu0 %205
      %v208 = vlaneseq
      %v209 = vshrl.u32 %v208, 7
      %v210 = vsub.s32 0, %v209
      %v211 = vrot.slane %v103, %v210
      %v213 = vsel %vm187, %v211, 0.0
      %v214 = vsel %vm188, %v211, 0.0
      %v215 = vsel %vm189, %v211, 0.0
      %v216 = vsel %vm190, %v211, 0.0
      %v217 = vsel %vm104, %v213, 0.0
      %218 = vadd.xlane.f32.xlu0 %v217
      %v219 = vpop.xlane.xlu0 %218
      %v220 = vsel %vm104, %v214, 0.0
      %221 = vadd.xlane.f32.xlu0 %v220
      %v222 = vpop.xlane.xlu0 %221
      %v223 = vsel %vm104, %v215, 0.0
      %224 = vadd.xlane.f32.xlu0 %v223
      %v225 = vpop.xlane.xlu0 %224
      %v226 = vsel %vm104, %v216, 0.0
      %227 = vadd.xlane.f32.xlu0 %v226
      %v228 = vpop.xlane.xlu0 %227
      %s229 = smul.u32 %s82, 32
      %v230 = vlaneseq
      %v231 = vshrl.u32 %v230, 7
      %v232 = vadd.s32 %v231, 8
      %v233 = vadd.s32 %v231, 16
      %v234 = vadd.s32 %v231, 24
      %v235 = vstv %s229
      %v236 = vadd.s32 %v235, %v231
      %v237 = vadd.s32 %v235, %v232
      %v238 = vadd.s32 %v235, %v233
      %v239 = vadd.s32 %v235, %v234
      %vm240 = vcmp.lt.s32.totalorder %v236, 32
      %vm241 = vcmp.lt.s32.totalorder %v237, 32
      %vm242 = vcmp.lt.s32.totalorder %v238, 32
      %vm243 = vcmp.lt.s32.totalorder %v239, 32
      %vm244 = vcmp.ne.s32.totalorder %v99, 4294967196
      %vm245 = vcmp.ne.s32.totalorder %v100, 4294967196
      %vm246 = vcmp.ne.s32.totalorder %v101, 4294967196
      %vm247 = vcmp.ne.s32.totalorder %v102, 4294967196
      %vm248 = vmand %vm240, %vm244
      %vm249 = vmand %vm241, %vm245
      %vm250 = vmand %vm242, %vm246
      %vm251 = vmand %vm243, %vm247
      %s252 = sld [smem:[#allocation2]]
      %v253 = vsub.f32 0.0, %v219
      %v254 = vsub.f32 0.0, %v222
      %v255 = vsub.f32 0.0, %v225
      %v256 = vsub.f32 0.0, %v228
      %v257 = vmul.f32 %v253, %v197
      %v258 = vmul.f32 %v254, %v200
      %v259 = vmul.f32 %v255, %v203
      %v260 = vmul.f32 %v256, %v206
      %v261 = vsel %vm248, %v257, 0.0
      %v262 = vsel %vm249, %v258, 0.0
      %v263 = vsel %vm250, %v259, 0.0
      %v264 = vsel %vm251, %v260, 0.0
      %vm265 = vcmask 7168
      %v266 = vsel %vm265, %v261, 0.0
      %v267 = vsel %vm265, %v262, 0.0
      %v268 = vadd.f32 %v266, %v267
      %v269 = vsel %vm265, %v263, 0.0
      %v270 = vadd.f32 %v268, %v269
      %v271 = vsel %vm265, %v264, 0.0
      %v272 = vadd.f32 %v270, %v271
      %273 = vadd.xlane.f32.xlu0 %v272
      %v274 = vpop.xlane.xlu0 %273
      %v275 = vrot.slane %v274, 4
      %v276 = vadd.f32 %v274, %v275
      %v277 = vrot.slane %v276, 2
      %v278 = vadd.f32 %v276, %v277
      %v279 = vrot.slane %v278, 1
      %v280 = vadd.f32 %v278, %v279
      %s281 = vtos %v280
      %s282 = sadd.f32 %s252, %s281
      %s283 = scalar_lea.smem [#allocation2], 0
      %284 = sst [smem:[%s283]] %s282
      %s285 = sld [smem:[#allocation2 + $0x1]]
      %v286 = vsel %vm248, %v219, 0.0
      %v287 = vsel %vm249, %v222, 0.0
      %v288 = vsel %vm250, %v225, 0.0
      %v289 = vsel %vm251, %v228, 0.0
      %v290 = vsel %vm265, %v286, 0.0
      %v291 = vsel %vm265, %v287, 0.0
      %v292 = vadd.f32 %v290, %v291
      %v293 = vsel %vm265, %v288, 0.0
      %v294 = vadd.f32 %v292, %v293
      %v295 = vsel %vm265, %v289, 0.0
      %v296 = vadd.f32 %v294, %v295
      %297 = vadd.xlane.f32.xlu0 %v296
      %v298 = vpop.xlane.xlu0 %297
      %v299 = vrot.slane %v298, 4
      %v300 = vadd.f32 %v298, %v299
      %v301 = vrot.slane %v300, 2
      %v302 = vadd.f32 %v300, %v301
      %v303 = vrot.slane %v302, 1
      %v304 = vadd.f32 %v302, %v303
      %s305 = vtos %v304
      %s306 = sadd.f32 %s285, %s305
      %s307 = scalar_lea.smem [#allocation2], 1
      %308 = sst [smem:[%s307]] %s306
    $region21: #{tpu_custom_call.1} parent=1 // pred_fallthru
      _
    // Predicated region
    $region22: #{tpu_custom_call.1} parent=1 // pred_check
      %p309 = pneg %p84
    $region23: #{tpu_custom_call.1} parent=1 // pred_check_branch
      %311 = sbr.rel (%p309) target = $region25
    $region24: #{tpu_custom_call.1} parent=1 // pred_region
      %s312 = sld [smem:[#allocation2]]
      %v313 = vstv %s312
      %314 = vst [vmem:[#allocation3] sm:$0xff] %v313
      %s315 = sld [smem:[#allocation2 + $0x1]]
      %v316 = vstv %s315
      %317 = vst [vmem:[#allocation5] sm:$0xff] %v316
    $region25: #{tpu_custom_call.1} parent=1 // pred_fallthru
      _
    // Predicated region
    $region26: #{tpu_custom_call.1} parent=1 // pred_check
      _
    $region27: #{tpu_custom_call.1} parent=1 // pred_check_branch
      %319 = sbr.rel (0) target = $region29
    $region28: #{tpu_custom_call.1} parent=1 // pred_region
      %s321 = ssub.s32 128, 128
      %322 = vsyncadd [#allocation4], %s321
      %s324 = sshll.u32 [#allocation3], 4
      %s325 = int_to_ptr.vmem [resolvable:$true] %s324
      %327 = dma.vmem_to_hbm [thread:$0]  %s325, 128, %s3, [#allocation4]
    $region29: #{tpu_custom_call.1} parent=1 // pred_fallthru
      _
    // Predicated region
    $region30: #{tpu_custom_call.1} parent=1 // pred_check
      _
    $region31: #{tpu_custom_call.1} parent=1 // pred_check_branch
      %329 = sbr.rel (0) target = $region33
    $region32: #{tpu_custom_call.1} parent=1 // pred_region
      %s331 = ssub.s32 128, 128
      %332 = vsyncadd [#allocation6], %s331
      %s334 = sshll.u32 [#allocation5], 4
      %s335 = int_to_ptr.vmem [resolvable:$true] %s334
      %337 = dma.vmem_to_hbm [thread:$0]  %s335, 128, %s4, [#allocation6]
    $region33: #{tpu_custom_call.1} parent=1 // pred_fallthru
      _
    // Predicated region
    $region34: #{tpu_custom_call.1} parent=1 // pred_check
      _
    $region35: #{tpu_custom_call.1} parent=1 // pred_check_branch
      %339 = sbr.rel (0) target = $region37
    $region36: #{tpu_custom_call.1} parent=1 // pred_region
      %340 = dma.done [#allocation4], 128
    $region37: #{tpu_custom_call.1} parent=1 // pred_fallthru
      _
    // Predicated region
    $region38: #{tpu_custom_call.1} parent=1 // pred_check
      _
    $region39: #{tpu_custom_call.1} parent=1 // pred_check_branch
      %342 = sbr.rel (0) target = $region41
    $region40: #{tpu_custom_call.1} parent=1 // pred_region
      %343 = dma.done [#allocation6], 128
    $region41: #{tpu_custom_call.1} parent=1 // pred_fallthru
      _
    %344 = vsyncpa [#allocation4], 1
    %345 = vsyncpa [#allocation6], 1

</llo_original>
